<compile_context>
chip_gen: v7x
topology: tpu7x:2x2x1
jax: 0.10.0
libtpu: 0.0.40
codegen_flags: <defaults>
</compile_context>

<pallas_src>
import jax
import jax.numpy as jnp
from jax.experimental import pallas as pl
from jax.experimental.pallas import tpu as pltpu


def _round_up(v, m):
    return (v + m - 1) // m * m


# ---------------------------------------------------------------------------
# Pallas kernel: one (row-tile, relation) GAT softmax + aggregation step
# ---------------------------------------------------------------------------

def meta_gat_kernel(counts_ref,   # (n_tiles, R) int32  — scalar prefetch (SMEM)
                    s1_ref,       # (1, tm, 1)   f32    — src scores  h_i . a1
                    s2_ref,       # (1, 1, Npad) f32    — nbr scores  h_j . a2
                    h_ref,        # (1, Npad, Dpad) bf16 — H_r (precomputed)
                    adj_ref,      # (1, tm, Npad) int8   — edge multiplicities
                    o_ref):       # (tm, Dpad) f32       — resident over relations
    i = pl.program_id(0)          # source-row tile  ("parallel")
    r = pl.program_id(1)          # relation         ("arbitrary", accumulated)

    @pl.when(r == 0)
    def _init():
        o_ref[...] = jnp.zeros_like(o_ref)

    # Skip relations with no edge landing in this row tile.
    @pl.when(counts_ref[i, r] > 0)
    def _compute():
        # rank-1 attention logits: e[i,j] = LeakyReLU(0.2)(s1[i] + s2[j])
        e = s1_ref[0] + s2_ref[0]                      # (tm, Npad)
        e = jnp.where(e > 0, e, 0.2 * e)

        # multiplicity-weighted masked row softmax over neighbours
        adj_f = adj_ref[0].astype(jnp.float32)         # (tm, Npad)
        e_m = jnp.where(adj_f > 0, e, -jnp.inf)
        m = jnp.max(e_m, axis=1, keepdims=True)
        m_safe = jnp.where(m > -jnp.inf, m, 0.0)       # rows with no edges
        # exp kept in f32 (safe on all generations; bf16 exp is a v6e/v7x-only
        # EUP micro-opt).
        p = adj_f * jnp.exp(e_m - m_safe)              # un-normalized alpha * mult
        denom = jnp.sum(p, axis=1, keepdims=True)
        inv = jnp.where(denom > 0, pl.reciprocal(denom, approx=True), 0.0)

        # aggregate neighbours (bf16 MXU, f32 accumulation over relations)
        out_r = jnp.dot(p.astype(jnp.bfloat16), h_ref[0],
                        preferred_element_type=jnp.float32)   # (tm, Dpad)
        o_ref[...] += out_r * inv


# ---------------------------------------------------------------------------
# Graph preprocessing (build ONCE per graph and cache across forward calls)
# ---------------------------------------------------------------------------

def build_graph(edge_index, edge_type, num_relations, n_pad, tm):
    """Per-relation int8 adjacency (edge multiplicity) + per-tile edge counts."""
    row, col = edge_index[0], edge_index[1]
    n_tiles = n_pad // tm
    adj_i8, counts = [], []
    for r in range(num_relations):          # per relation -> 4x smaller transient
        sel = (edge_type == r).astype(jnp.int32)
        a = jnp.zeros((n_pad, n_pad), jnp.int32).at[row, col].add(sel)
        counts.append(a.reshape(n_tiles, tm, n_pad).sum(axis=(1, 2)))
        # clamp: >127 parallel edges between one node pair would wrap in int8
        adj_i8.append(jnp.clip(a, 0, 127).astype(jnp.int8))
    adj = jnp.stack(adj_i8)                                    # (R, n_pad, n_pad) i8
    counts = jnp.stack(counts, axis=1).astype(jnp.int32)       # (n_tiles, R)
    return adj, counts


# ---------------------------------------------------------------------------
# Wrapper: hypernet + projections in XLA, softmax/aggregation in the kernel
# ---------------------------------------------------------------------------

def meta_gat_forward(x, edge_index, edge_type, task_id, params, *, row_tile=256):
    N, F = x.shape
    R, _, D = params['w_hidden'].shape
    T = params['task_emb'].shape[1]

    d_pad = _round_up(D, 128)                       # lane-dense output width
    tm = min(row_tile, _round_up(N, 8))
    if _round_up(N, tm) // tm < 2 and N >= 64:      # >=2 row tiles -> both v7x TCs
        tm = _round_up(pl.cdiv(N, 2), 32)
    n_pad = _round_up(N, tm)
    n_tiles = n_pad // tm

    # ---- hypernetwork (hoisted out of the kernel): a = MLP(task_embed)
    t_embed = params['task_emb'][task_id].reshape(1, T)
    hh = jnp.maximum(t_embed @ params['hyper_w1'] + params['hyper_b1'], 0.0)
    a_vec = (hh @ params['hyper_w2'] + params['hyper_b2']).reshape(-1)   # (2D,)
    a1, a2 = a_vec[:D], a_vec[D:]

    # ---- per-relation projections H_r = x @ W_r + b_r (once, f32) and the
    #      rank-1 score vectors (hoisted — no per-step recompute / transpose).
    h_f32 = jnp.einsum('nf,rfd->rnd', x.astype(jnp.float32),
                       params['w_hidden']) + params['b_hidden']          # (R,N,D)
    s_src = jnp.einsum('rnd,d->rn', h_f32, a1)                           # (R,N)
    s_nbr = jnp.einsum('rnd,d->rn', h_f32, a2)                           # (R,N)

    # padded / dtype-compressed kernel operands
    h_bf = jnp.zeros((R, n_pad, d_pad), jnp.bfloat16).at[:, :N, :D].set(
        h_f32.astype(jnp.bfloat16))
    s1 = jnp.zeros((R, n_pad, 1), jnp.float32).at[:, :N, 0].set(s_src)
    s2 = jnp.zeros((R, 1, n_pad), jnp.float32).at[:, 0, :N].set(s_nbr)

    adj_i8, counts = build_graph(edge_index, edge_type, R, n_pad, tm)

    # explicit VMEM budget (v7x: 64 MiB physical, 32 MiB default scoped limit)
    vmem_need = (2 * (n_pad * d_pad * 2        # H_r bf16 (double buffered)
                      + tm * n_pad             # adjacency int8
                      + n_pad * 4 + tm * 4     # s2 / s1
                      + tm * d_pad * 4)        # output block
                 + 4 * tm * n_pad * 4)         # e / e_m / p / adj_f temporaries
    vmem_limit = int(min(128 * 1024 * 1024, max(32 * 1024 * 1024, 2 * vmem_need)))

    cost = pl.CostEstimate(
        flops=int(R * (2 * n_pad * n_pad * d_pad + 8 * n_pad * n_pad)),
        transcendentals=int(R * n_pad * n_pad),
        bytes_accessed=int(R * n_pad * n_pad                    # int8 adjacency
                           + 2 * R * n_tiles * n_pad * d_pad    # bf16 H_r stream
                           + 4 * n_pad * d_pad))                # f32 output

    out = pl.pallas_call(
        meta_gat_kernel,
        out_shape=jax.ShapeDtypeStruct((n_pad, d_pad), jnp.float32),
        grid_spec=pltpu.PrefetchScalarGridSpec(
            num_scalar_prefetch=1,                  # per-(tile, relation) edge counts
            grid=(n_tiles, R),                      # relation last -> resident accumulator
            in_specs=[
                pl.BlockSpec((1, tm, 1), lambda i, r, c: (r, i, 0)),        # s1 (src)
                pl.BlockSpec((1, 1, n_pad), lambda i, r, c: (r, 0, 0)),     # s2 (nbr)
                pl.BlockSpec((1, n_pad, d_pad), lambda i, r, c: (r, 0, 0)), # H_r bf16
                pl.BlockSpec((1, tm, n_pad), lambda i, r, c: (r, i, 0)),    # adjacency
            ],
            out_specs=pl.BlockSpec((tm, d_pad), lambda i, r, c: (i, 0)),
        ),
        compiler_params=pltpu.CompilerParams(
            dimension_semantics=("parallel", "arbitrary"),
            vmem_limit_bytes=vmem_limit),
        cost_estimate=cost,
    )(counts, s1, s2, h_bf, adj_i8)

    return out[:N, :D]


# ---------------------------------------------------------------------------
# Pure-JAX reference (edge-list scatter softmax), for validation
# ---------------------------------------------------------------------------

def meta_gat_reference(x, edge_index, edge_type, task_id, params):
    N = x.shape[0]
    R, _, D = params['w_hidden'].shape
    T = params['task_emb'].shape[1]
    t_embed = params['task_emb'][task_id].reshape(1, T)
    hh = jnp.maximum(t_embed @ params['hyper_w1'] + params['hyper_b1'], 0.0)
    a_vec = (hh @ params['hyper_w2'] + params['hyper_b2']).reshape(-1)
    a1, a2 = a_vec[:D], a_vec[D:]
    row, col = edge_index[0], edge_index[1]
    out = jnp.zeros((N, D), jnp.float32)
    for r in range(R):
        sel = (edge_type == r).astype(jnp.float32)
        h = x @ params['w_hidden'][r] + params['b_hidden'][r]          # (N, D)
        e = h[row] @ a1 + h[col] @ a2                                  # (E,)
        e = jnp.where(e > 0, e, 0.2 * e)
        neg = jnp.where(sel > 0, e, -jnp.inf)
        row_max = jnp.full((N,), -jnp.inf, jnp.float32).at[row].max(neg)
        row_max = jnp.where(jnp.isfinite(row_max), row_max, 0.0)
        p = jnp.where(sel > 0, jnp.exp(e - row_max[row]), 0.0)
        denom = jnp.zeros((N,), jnp.float32).at[row].add(p)
        alpha = p / jnp.where(denom[row] > 0, denom[row], 1.0)
        out = out + jnp.zeros((N, D), jnp.float32).at[row].add(alpha[:, None] * h[col])
    return out


# ---------------------------------------------------------------------------
# Deterministic parameter init + example run
# ---------------------------------------------------------------------------

def init_params(key, num_tasks, num_relations, task_embed_dim, in_dim, out_dim):
    D = out_dim // 2
    ks = jax.random.split(key, 8)

    def uinit(k, shape, fan_in):
        b = float(fan_in) ** -0.5
        return jax.random.uniform(k, shape, jnp.float32, -b, b)

    return {
        'task_emb': jax.random.normal(ks[0], (num_tasks, task_embed_dim), jnp.float32),
        'hyper_w1': uinit(ks[1], (task_embed_dim, 128), task_embed_dim),
        'hyper_b1': uinit(ks[2], (128,), task_embed_dim),
        'hyper_w2': uinit(ks[3], (128, out_dim), 128),
        'hyper_b2': uinit(ks[4], (out_dim,), 128),
        'w_hidden': uinit(ks[5], (num_relations, in_dim, D), in_dim),
        'b_hidden': uinit(ks[6], (num_relations, 1, D), in_dim),
    }


if __name__ == "__main__":
    num_tasks, num_relations = 3, 2
    task_embed_dim, in_dim, out_dim = 8, 16, 16
    N, E = 16, 48

    key = jax.random.PRNGKey(0)
    kp, kx, kr, kc = jax.random.split(key, 4)

    params = init_params(kp, num_tasks, num_relations, task_embed_dim, in_dim, out_dim)

    x = jax.random.normal(kx, (N, in_dim), jnp.float32)
    row = jax.random.randint(kr, (E,), 0, N)
    col = jax.random.randint(kc, (E,), 0, N)
    edge_index = jnp.stack([row, col], axis=0)                   # (2, E)
    edge_type = jnp.arange(E, dtype=jnp.int32) % num_relations   # every relation populated
    task_id = jnp.int32(1)

    out = meta_gat_forward(x, edge_index, edge_type, task_id, params)
    out = jax.block_until_ready(out)

    assert out.shape == (N, out_dim // 2), out.shape
    assert bool(jnp.all(jnp.isfinite(out)))

    ref = meta_gat_reference(x, edge_index, edge_type, task_id, params)
    err = float(jnp.max(jnp.abs(out - ref)))
    # bf16 aggregation operands + approx reciprocal -> loose tolerance
    assert err < 5e-2, f"max abs err vs reference = {err}"

    print("KERNEL_OK")
</pallas_src>

<mosaic_0001>
module attributes {stable_mosaic.version = 11 : i64} {
  func.func @meta_gat_kernel(%arg0: i32, %arg1: i32, %arg2: memref<1x2xi32, #tpu.memory_space<smem>>, %arg3: memref<1x16x1xf32, #tpu.memory_space<vmem>>, %arg4: memref<1x1x16xf32, #tpu.memory_space<vmem>>, %arg5: memref<1x16x128xbf16, #tpu.memory_space<vmem>>, %arg6: memref<1x16x16xi8, #tpu.memory_space<vmem>>, %arg7: memref<16x128xf32, #tpu.memory_space<vmem>>) attributes {dimension_semantics = [#tpu.dimension_semantics<parallel>, #tpu.dimension_semantics<arbitrary>], iteration_bounds = array<i64: 1, 2>, scalar_prefetch = 1 : i64, scratch_operands = 0 : i64, tpu.core_type = #tpu.core_type<tc>, window_params = [{transform_indices = @transform_0, window_bounds = array<i64: 1, 16, 1>}, {transform_indices = @transform_1, window_bounds = array<i64: 1, 1, 16>}, {transform_indices = @transform_2, window_bounds = array<i64: 1, 16, 128>}, {transform_indices = @transform_3, window_bounds = array<i64: 1, 16, 16>}, {transform_indices = @transform_4, window_bounds = array<i64: 16, 128>}]} {
    %c0_i32 = arith.constant 0 : i32
    %0 = arith.cmpi eq, %arg1, %c0_i32 : i32
    %1 = arith.extui %0 : i1 to i32
    %c0_i32_0 = arith.constant 0 : i32
    %2 = arith.cmpi ne, %1, %c0_i32_0 : i32
    scf.if %2 {
      %cst = arith.constant 0.000000e+00 : f32
      %9 = vector.broadcast %cst : f32 to vector<16x128xf32>
      %c0 = arith.constant 0 : index
      %c0_3 = arith.constant 0 : index
      %10 = vector.load %arg7[%c0, %c0_3] : memref<16x128xf32, #tpu.memory_space<vmem>>, vector<16x128xf32>
      tpu.vector_store %arg7[%c0, %c0_3], %9 {strides = array<i32>} : memref<16x128xf32, #tpu.memory_space<vmem>>, vector<16x128xf32>,
    } else {
    }
    %3 = arith.index_cast %arg0 : i32 to index
    %4 = arith.index_cast %arg1 : i32 to index
    %5 = memref.load %arg2[%3, %4] : memref<1x2xi32, #tpu.memory_space<smem>>
    %c0_i32_1 = arith.constant 0 : i32
    %6 = arith.cmpi sgt, %5, %c0_i32_1 : i32
    %7 = arith.extui %6 : i1 to i32
    %c0_i32_2 = arith.constant 0 : i32
    %8 = arith.cmpi ne, %7, %c0_i32_2 : i32
    scf.if %8 {
      %c0 = arith.constant 0 : index
      %c0_3 = arith.constant 0 : index
      %c0_4 = arith.constant 0 : index
      %9 = vector.load %arg3[%c0, %c0_3, %c0_4] : memref<1x16x1xf32, #tpu.memory_space<vmem>>, vector<1x16x1xf32>
      %10 = vector.shape_cast %9 : vector<1x16x1xf32> to vector<16x1xf32>
      %c0_5 = arith.constant 0 : index
      %c0_6 = arith.constant 0 : index
      %c0_7 = arith.constant 0 : index
      %11 = vector.load %arg4[%c0_5, %c0_6, %c0_7] : memref<1x1x16xf32, #tpu.memory_space<vmem>>, vector<1x1x16xf32>
      %12 = vector.shape_cast %11 : vector<1x1x16xf32> to vector<1x16xf32>
      %13 = vector.broadcast %10 : vector<16x1xf32> to vector<16x16xf32>
      %14 = vector.broadcast %12 : vector<1x16xf32> to vector<16x16xf32>
      %15 = arith.addf %13, %14 : vector<16x16xf32>
      %cst = arith.constant 0.000000e+00 : f32
      %16 = vector.broadcast %cst : f32 to vector<16x16xf32>
      %17 = arith.cmpf ogt, %15, %16 : vector<16x16xf32>
      %cst_8 = arith.constant 2.000000e-01 : f32
      %18 = vector.broadcast %cst_8 : f32 to vector<16x16xf32>
      %19 = arith.mulf %18, %15 : vector<16x16xf32>
      %20 = arith.select %17, %15, %19 : vector<16x16xi1>, vector<16x16xf32>
      %c0_9 = arith.constant 0 : index
      %c0_10 = arith.constant 0 : index
      %c0_11 = arith.constant 0 : index
      %21 = vector.load %arg6[%c0_9, %c0_10, %c0_11] : memref<1x16x16xi8, #tpu.memory_space<vmem>>, vector<1x16x16xi8>
      %22 = vector.shape_cast %21 : vector<1x16x16xi8> to vector<16x16xi8>
      %23 = arith.sitofp %22 : vector<16x16xi8> to vector<16x16xf32>
      %cst_12 = arith.constant 0.000000e+00 : f32
      %24 = vector.broadcast %cst_12 : f32 to vector<16x16xf32>
      %25 = arith.cmpf ogt, %23, %24 : vector<16x16xf32>
      %cst_13 = arith.constant 0xFF800000 : f32
      %26 = vector.broadcast %cst_13 : f32 to vector<16x16xf32>
      %27 = arith.select %25, %20, %26 : vector<16x16xi1>, vector<16x16xf32>
      %cst_14 = arith.constant dense<0xFF800000> : vector<16xf32>
      %28 = vector.multi_reduction <maximumf>, %27, %cst_14 [1] : vector<16x16xf32> to vector<16xf32>
      %29 = vector.shape_cast %28 : vector<16xf32> to vector<16x1xf32>
      %cst_15 = arith.constant 0xFF800000 : f32
      %30 = vector.broadcast %cst_15 : f32 to vector<16x1xf32>
      %31 = arith.cmpf ogt, %29, %30 : vector<16x1xf32>
      %cst_16 = arith.constant 0.000000e+00 : f32
      %32 = vector.broadcast %cst_16 : f32 to vector<16x1xf32>
      %33 = arith.select %31, %29, %32 : vector<16x1xi1>, vector<16x1xf32>
      %34 = vector.broadcast %33 : vector<16x1xf32> to vector<16x16xf32>
      %35 = arith.subf %27, %34 : vector<16x16xf32>
      %36 = math.exp %35 : vector<16x16xf32>
      %37 = arith.mulf %23, %36 : vector<16x16xf32>
      %cst_17 = arith.constant dense<0.000000e+00> : vector<16xf32>
      %38 = vector.multi_reduction <add>, %37, %cst_17 [1] : vector<16x16xf32> to vector<16xf32>
      %39 = vector.shape_cast %38 : vector<16xf32> to vector<16x1xf32>
      %cst_18 = arith.constant 0.000000e+00 : f32
      %40 = vector.broadcast %cst_18 : f32 to vector<16x1xf32>
      %41 = arith.cmpf ogt, %39, %40 : vector<16x1xf32>
      %42 = tpu.reciprocal %39 {approx = true} : vector<16x1xf32> -> vector<16x1xf32>
      %cst_19 = arith.constant 0.000000e+00 : f32
      %43 = vector.broadcast %cst_19 : f32 to vector<16x1xf32>
      %44 = arith.select %41, %42, %43 : vector<16x1xi1>, vector<16x1xf32>
      %45 = arith.truncf %37 : vector<16x16xf32> to vector<16x16xbf16>
      %c0_20 = arith.constant 0 : index
      %c0_21 = arith.constant 0 : index
      %c0_22 = arith.constant 0 : index
      %46 = vector.load %arg5[%c0_20, %c0_21, %c0_22] : memref<1x16x128xbf16, #tpu.memory_space<vmem>>, vector<1x16x128xbf16>
      %47 = vector.shape_cast %46 : vector<1x16x128xbf16> to vector<16x128xbf16>
      %cst_23 = arith.constant dense<0.000000e+00> : vector<16x128xf32>
      %48 = tpu.matmul %45, %47, %cst_23 {dimension_numbers = #tpu.dot_dimension_numbers<[1], [0], [0], [1], [0, 0, 1, 1], [], []>} : vector<16x16xbf16>, vector<16x128xbf16>, vector<16x128xf32> -> vector<16x128xf32>
      %c0_24 = arith.constant 0 : index
      %c0_25 = arith.constant 0 : index
      %49 = vector.load %arg7[%c0_24, %c0_25] : memref<16x128xf32, #tpu.memory_space<vmem>>, vector<16x128xf32>
      %50 = vector.broadcast %44 : vector<16x1xf32> to vector<16x128xf32>
      %51 = arith.mulf %48, %50 : vector<16x128xf32>
      %52 = arith.addf %49, %51 : vector<16x128xf32>
      %c0_26 = arith.constant 0 : index
      %c0_27 = arith.constant 0 : index
      %53 = vector.load %arg7[%c0_26, %c0_27] : memref<16x128xf32, #tpu.memory_space<vmem>>, vector<16x128xf32>
      tpu.vector_store %arg7[%c0_26, %c0_27], %52 {strides = array<i32>} : memref<16x128xf32, #tpu.memory_space<vmem>>, vector<16x128xf32>,
    } else {
    }
    return
  }
  func.func @transform_0(%arg0: i32, %arg1: i32, %arg2: memref<1x2xi32, #tpu.memory_space<smem>>) -> (i32, i32, i32) {
    %c0_i32 = arith.constant 0 : i32
    %c0_i32_0 = arith.constant 0 : i32
    return %arg1, %arg0, %c0_i32 : i32, i32, i32
  }
  func.func @transform_1(%arg0: i32, %arg1: i32, %arg2: memref<1x2xi32, #tpu.memory_space<smem>>) -> (i32, i32, i32) {
    %c0_i32 = arith.constant 0 : i32
    %c0_i32_0 = arith.constant 0 : i32
    %c0_i32_1 = arith.constant 0 : i32
    return %arg1, %c0_i32, %c0_i32_0 : i32, i32, i32
  }
  func.func @transform_2(%arg0: i32, %arg1: i32, %arg2: memref<1x2xi32, #tpu.memory_space<smem>>) -> (i32, i32, i32) {
    %c0_i32 = arith.constant 0 : i32
    %c0_i32_0 = arith.constant 0 : i32
    %c0_i32_1 = arith.constant 0 : i32
    return %arg1, %c0_i32, %c0_i32_0 : i32, i32, i32
  }
  func.func @transform_3(%arg0: i32, %arg1: i32, %arg2: memref<1x2xi32, #tpu.memory_space<smem>>) -> (i32, i32, i32) {
    %c0_i32 = arith.constant 0 : i32
    %c0_i32_0 = arith.constant 0 : i32
    return %arg1, %arg0, %c0_i32 : i32, i32, i32
  }
  func.func @transform_4(%arg0: i32, %arg1: i32, %arg2: memref<1x2xi32, #tpu.memory_space<smem>>) -> (i32, i32) {
    %c0_i32 = arith.constant 0 : i32
    %c0_i32_0 = arith.constant 0 : i32
    return %arg0, %c0_i32 : i32, i32
  }
}

</mosaic_0001>

<llo_original>
// kernel: tpu_custom_call.1
$region0: #{tpu_custom_call.1}
  #allocation0 [shape = 'u32[]', space=smem, size = 0x4, offset = 0x4, fixed_abs, tag = 'smem constant byte address 0x4 - core index']
  #allocation1 [shape = 'u32[144,128]{1,0:T(1,128)}', space=vmem, size = 0x12000, scoped, tag = 'internal scratch']
  #allocation2 [shape = 's32[1]{0}', space=sflag, size = 0x4, scoped, tag = 'scoped memory for tpu_custom_call.1']
  #allocation3 [shape = 'u8[512]{0}', space=smem, size = 0x200, scoped, tag = 'prefetched SMEM operand 0']
  %s0 = inlined_call_operand.vmem [shape: s32[1,2], index: 0, kind: input, shape index: {}]
  %s1 = inlined_call_operand.vmem [shape: f32[2,16,1], index: 1, kind: input, shape index: {}]
  %s2 = inlined_call_operand.vmem [shape: f32[2,1,16], index: 2, kind: input, shape index: {}]
  %s3 = inlined_call_operand.vmem [shape: bf16[2,16,128], index: 3, kind: input, shape index: {}]
  %s4 = inlined_call_operand.vmem [shape: s8[2,16,16], index: 4, kind: input, shape index: {}]
  %s5 = inlined_call_operand.hbm [shape: f32[16,128], index: 5, kind: output, shape index: {}]
  %s6 = sld [smem:[#allocation0]]
  $region57: #{tpu_custom_call.1} parent=0
    _
  %s8 = ssub.s32 1, %s6
  %s9 = scalar_select 0, %s8, %s6
  %s10 = sshll.u32 %s0, 4
  %s11 = int_to_ptr.vmem [resolvable:$true] %s10
  %13 = dma.vmem_to_smem %s11, 16, [#allocation3], [#allocation2]
  %14 = dma.done [#allocation2], 16
  %15 = sfence
  $region1: #{tpu_custom_call.1} parent=0
    #allocation4 [shape = 'u8[8192]{0}', space=vmem, size = 0x2000, scoped, tag = 'output window, operand 0, single buffered']
    #allocation5 [shape = 's32[2]{0}', space=sflag, size = 0x8, scoped, tag = 'scoped memory for tpu_custom_call.1']
    %16 = vsyncpa [#allocation5], 0
    loop: start=0, step=1, limit=4
    $region2: #{tpu_custom_call.1} parent=1 // loop_pre_header
      _
    $region3: #{tpu_custom_call.1} parent=1 // loop_header
      %s18 = sphi 0, %s22
      %p19 = scmp.ge.s32.totalorder %s18, 4
      %s25 = sphi 0, %s37
      %s26 = sphi 0, %s33
      %s27 = sphi 0, %s25
      %s28 = sphi 0, %s26
      %s29 = sphi 0, %s27
      %s30 = sphi 0, %s28
      %s42 = sphi 0, %s44
      %s45 = sphi 0, %s42
      %s46 = sphi 0, %s45
      %s62 = sphi 0, %s46
      %s68 = sphi 0, %s70
      %s71 = sphi 0, %s68
      %s72 = sphi 0, %s71
      %s88 = sphi 0, %s72
      %s94 = sphi 0, %s96
      %s97 = sphi 0, %s94
      %s98 = sphi 0, %s97
      %s114 = sphi 0, %s98
      %s122 = sphi 0, %s124
      %s125 = sphi 0, %s122
      %s126 = sphi 0, %s125
      %s142 = sphi 0, %s126
      %s148 = sphi 0, %s150
      %s151 = sphi 0, %s148
      %s152 = sphi 0, %s151
      %s168 = sphi 0, %s152
    $region4: #{tpu_custom_call.1} parent=1 // loop_header_branch
      %21 = sbr.rel (%p19) target = $region8
    $region5: #{tpu_custom_call.1} parent=1 // loop_body
      %s23 = ssub.s32 %s18, 1
      %s24 = ssub.s32 %s18, 2
      %s31 = sadd.s32 1, %s26
      %p32 = scmp.ge.s32.totalorder %s31, 2
      %s33 = scalar_select %p32, 0, %s31
      %s34 = sadd.s32 1, %s25
      %s35 = scalar_select %p32, %s34, %s25
      %p36 = scmp.ge.s32.totalorder %s35, 1
      %s37 = scalar_select %p36, 0, %s35
      %s38 = ssub.s32 %s26, %s33
      %s39 = ssub.s32 %s25, %s37
      %s40 = sor.u32 %s38, %s39
      %p41 = scmp.eq.s32.totalorder %s40, 0
      %s43 = sadd.s32 %s42, 1
      %s44 = scalar_select %p41, %s42, %s43
      %p47 = pneg %p41
      %p48 = scmp.eq.s32.totalorder %s18, 1
      %p49 = por %p47, %p48
      %p50 = scmp.ne.s32.totalorder %s42, %s45
      %p51 = scmp.eq.s32.totalorder %s18, 0
      %p52 = por %p50, %p51
      %p53 = scmp.ne.s32.totalorder %s42, %s45
      %p54 = scmp.eq.s32.totalorder %s23, 1
      %p55 = por %p53, %p54
      %p56 = scmp.ne.s32.totalorder %s45, %s46
      %p57 = scmp.eq.s32.totalorder %s23, 0
      %p58 = por %p56, %p57
      %p59 = scmp.ne.s32.totalorder %s45, %s46
      %p60 = scmp.eq.s32.totalorder %s24, 1
      %p61 = por %p59, %p60
      %p63 = scmp.ne.s32.totalorder %s46, %s62
      %p64 = scmp.eq.s32.totalorder %s24, 0
      %p65 = por %p63, %p64
      %s66 = ssub.s32 %s26, %s33
      %p67 = scmp.eq.s32.totalorder %s66, 0
      %s69 = sadd.s32 %s68, 1
      %s70 = scalar_select %p67, %s68, %s69
      %p73 = pneg %p67
      %p74 = scmp.eq.s32.totalorder %s18, 1
      %p75 = por %p73, %p74
      %p76 = scmp.ne.s32.totalorder %s68, %s71
      %p77 = scmp.eq.s32.totalorder %s18, 0
      %p78 = por %p76, %p77
      %p79 = scmp.ne.s32.totalorder %s68, %s71
      %p80 = scmp.eq.s32.totalorder %s23, 1
      %p81 = por %p79, %p80
      %p82 = scmp.ne.s32.totalorder %s71, %s72
      %p83 = scmp.eq.s32.totalorder %s23, 0
      %p84 = por %p82, %p83
      %p85 = scmp.ne.s32.totalorder %s71, %s72
      %p86 = scmp.eq.s32.totalorder %s24, 1
      %p87 = por %p85, %p86
      %p89 = scmp.ne.s32.totalorder %s72, %s88
      %p90 = scmp.eq.s32.totalorder %s24, 0
      %p91 = por %p89, %p90
      %s92 = ssub.s32 %s26, %s33
      %p93 = scmp.eq.s32.totalorder %s92, 0
      %s95 = sadd.s32 %s94, 1
      %s96 = scalar_select %p93, %s94, %s95
      %p99 = pneg %p93
      %p100 = scmp.eq.s32.totalorder %s18, 1
      %p101 = por %p99, %p100
      %p102 = scmp.ne.s32.totalorder %s94, %s97
      %p103 = scmp.eq.s32.totalorder %s18, 0
      %p104 = por %p102, %p103
      %p105 = scmp.ne.s32.totalorder %s94, %s97
      %p106 = scmp.eq.s32.totalorder %s23, 1
      %p107 = por %p105, %p106
      %p108 = scmp.ne.s32.totalorder %s97, %s98
      %p109 = scmp.eq.s32.totalorder %s23, 0
      %p110 = por %p108, %p109
      %p111 = scmp.ne.s32.totalorder %s97, %s98
      %p112 = scmp.eq.s32.totalorder %s24, 1
      %p113 = por %p111, %p112
      %p115 = scmp.ne.s32.totalorder %s98, %s114
      %p116 = scmp.eq.s32.totalorder %s24, 0
      %p117 = por %p115, %p116
      %s118 = ssub.s32 %s26, %s33
      %s119 = ssub.s32 %s25, %s37
      %s120 = sor.u32 %s118, %s119
      %p121 = scmp.eq.s32.totalorder %s120, 0
      %s123 = sadd.s32 %s122, 1
      %s124 = scalar_select %p121, %s122, %s123
      %p127 = pneg %p121
      %p128 = scmp.eq.s32.totalorder %s18, 1
      %p129 = por %p127, %p128
      %p130 = scmp.ne.s32.totalorder %s122, %s125
      %p131 = scmp.eq.s32.totalorder %s18, 0
      %p132 = por %p130, %p131
      %p133 = scmp.ne.s32.totalorder %s122, %s125
      %p134 = scmp.eq.s32.totalorder %s23, 1
      %p135 = por %p133, %p134
      %p136 = scmp.ne.s32.totalorder %s125, %s126
      %p137 = scmp.eq.s32.totalorder %s23, 0
      %p138 = por %p136, %p137
      %p139 = scmp.ne.s32.totalorder %s125, %s126
      %p140 = scmp.eq.s32.totalorder %s24, 1
      %p141 = por %p139, %p140
      %p143 = scmp.ne.s32.totalorder %s126, %s142
      %p144 = scmp.eq.s32.totalorder %s24, 0
      %p145 = por %p143, %p144
      %s146 = ssub.s32 %s25, %s37
      %p147 = scmp.eq.s32.totalorder %s146, 0
      %s149 = sadd.s32 %s148, 1
      %s150 = scalar_select %p147, %s148, %s149
      %p153 = pneg %p147
      %p154 = scmp.eq.s32.totalorder %s18, 1
      %p155 = por %p153, %p154
      %p156 = scmp.ne.s32.totalorder %s148, %s151
      %p157 = scmp.eq.s32.totalorder %s18, 0
      %p158 = por %p156, %p157
      %p159 = scmp.ne.s32.totalorder %s148, %s151
      %p160 = scmp.eq.s32.totalorder %s23, 1
      %p161 = por %p159, %p160
      %p162 = scmp.ne.s32.totalorder %s151, %s152
      %p163 = scmp.eq.s32.totalorder %s23, 0
      %p164 = por %p162, %p163
      %p165 = scmp.ne.s32.totalorder %s151, %s152
      %p166 = scmp.eq.s32.totalorder %s24, 1
      %p167 = por %p165, %p166
      %p169 = scmp.ne.s32.totalorder %s152, %s168
      %p170 = scmp.eq.s32.totalorder %s24, 0
      %p171 = por %p169, %p170
      %p172 = scmp.le.s32.totalorder 1, %s18
      %p173 = scmp.lt.s32.totalorder %s18, 3
      %p174 = pnand %p172, %p173
      %p175 = pneg %p174
      // Predicated region
      $region9: #{tpu_custom_call.1} parent=5 // pred_check
        _
      $region10: #{tpu_custom_call.1} parent=5 // pred_check_branch
        %177 = sbr.rel (%p174) target = $region12
      $region11: #{tpu_custom_call.1} parent=5 // pred_region
        %s178 = ssub.s32 %s18, 1
      $region12: #{tpu_custom_call.1} parent=5 // pred_fallthru
        _
      %p179 = scmp.lt.s32.totalorder %s18, 2
      // Predicated region
      $region13: #{tpu_custom_call.1} parent=5 // pred_check
        %p180 = pneg %p179
      $region14: #{tpu_custom_call.1} parent=5 // pred_check_branch
        %182 = sbr.rel (%p180) target = $region16
      $region15: #{tpu_custom_call.1} parent=5 // pred_region
        // Predicated region
        $region17: #{tpu_custom_call.1} parent=15 // pred_check
          %p183 = pneg %p52
        $region18: #{tpu_custom_call.1} parent=15 // pred_check_branch
          %185 = sbr.rel (%p183) target = $region20
        $region19: #{tpu_custom_call.1} parent=15 // pred_region
          %s186 = smul.u32 2, %s25
          %p187 = scmp.lt.s32.totalorder %s26, 1
          %s188 = scalar_select %p187, %s26, 1
          %p189 = scmp.lt.s32.totalorder %s186, 1
          %s190 = scalar_select %p189, %s186, 1
          %s191 = smul.addr %s188, 2
          %s192 = sadd.s32 %s190, %s191
          %s193 = smul.addr %s192, 8
          %s194 = scalar_lea.vmem %s1, %s193
          %s195 = smul.u32 2, %s25
        $region20: #{tpu_custom_call.1} parent=15 // pred_fallthru
          _
        // Predicated region
        $region21: #{tpu_custom_call.1} parent=15 // pred_check
          %p196 = pneg %p78
        $region22: #{tpu_custom_call.1} parent=15 // pred_check_branch
          %198 = sbr.rel (%p196) target = $region24
        $region23: #{tpu_custom_call.1} parent=15 // pred_region
          %p199 = scmp.lt.s32.totalorder %s26, 1
          %s200 = scalar_select %p199, %s26, 1
          %s201 = scalar_lea.vmem %s2, %s200
        $region24: #{tpu_custom_call.1} parent=15 // pred_fallthru
          _
        // Predicated region
        $region25: #{tpu_custom_call.1} parent=15 // pred_check
          %p202 = pneg %p104
        $region26: #{tpu_custom_call.1} parent=15 // pred_check_branch
          %204 = sbr.rel (%p202) target = $region28
        $region27: #{tpu_custom_call.1} parent=15 // pred_region
          %p205 = scmp.lt.s32.totalorder %s26, 1
          %s206 = scalar_select %p205, %s26, 1
          %s207 = smul.addr %s206, 2
          %s208 = smul.addr %s207, 4
          %s209 = scalar_lea.vmem %s3, %s208
        $region28: #{tpu_custom_call.1} parent=15 // pred_fallthru
          _
        // Predicated region
        $region29: #{tpu_custom_call.1} parent=15 // pred_check
          %p210 = pneg %p132
        $region30: #{tpu_custom_call.1} parent=15 // pred_check_branch
          %212 = sbr.rel (%p210) target = $region32
        $region31: #{tpu_custom_call.1} parent=15 // pred_region
          %s213 = smul.u32 2, %s25
          %p214 = scmp.lt.s32.totalorder %s26, 1
          %s215 = scalar_select %p214, %s26, 1
          %p216 = scmp.lt.s32.totalorder %s213, 1
          %s217 = scalar_select %p216, %s213, 1
          %s218 = smul.addr %s215, 2
          %s219 = sadd.s32 %s217, %s218
          %s220 = smul.addr %s219, 2
          %s221 = scalar_lea.vmem %s4, %s220
          %s222 = smul.u32 2, %s25
        $region32: #{tpu_custom_call.1} parent=15 // pred_fallthru
          _
      $region16: #{tpu_custom_call.1} parent=5 // pred_fallthru
        _
      %p223 = scmp.le.s32.totalorder 1, %s18
      %p224 = scmp.lt.s32.totalorder %s18, 3
      %p225 = pnand %p223, %p224
      %p226 = pneg %p225
      // Predicated region
      $region33: #{tpu_custom_call.1} parent=5 // pred_check
        _
      $region34: #{tpu_custom_call.1} parent=5 // pred_check_branch
        %228 = sbr.rel (%p225) target = $region36
      $region35: #{tpu_custom_call.1} parent=5 // pred_region
        %s229 = ssub.s32 %s18, 1
        %s230 = smul.u32 2, %s27
        %p231 = scmp.lt.s32.totalorder %s28, 1
        %s232 = scalar_select %p231, %s28, 1
        %p233 = scmp.lt.s32.totalorder %s230, 1
        %s234 = scalar_select %p233, %s230, 1
        %s235 = smul.addr %s232, 2
        %s236 = sadd.s32 %s234, %s235
        %s237 = smul.addr %s236, 8
        %s238 = scalar_lea.vmem %s1, %s237
        %p239 = pneg %p58
        %p240 = pneg %p55
        %p241 = scmp.lt.s32.totalorder %s28, 1
        %s242 = scalar_select %p241, %s28, 1
        %s243 = scalar_lea.vmem %s2, %s242
        %p244 = pneg %p84
        %p245 = pneg %p81
        %p246 = scmp.lt.s32.totalorder %s28, 1
        %s247 = scalar_select %p246, %s28, 1
        %s248 = smul.addr %s247, 2
        %s249 = smul.addr %s248, 4
        %s250 = scalar_lea.vmem %s3, %s249
        %p251 = pneg %p110
        %p252 = pneg %p107
        %s253 = smul.u32 2, %s27
        %p254 = scmp.lt.s32.totalorder %s28, 1
        %s255 = scalar_select %p254, %s28, 1
        %p256 = scmp.lt.s32.totalorder %s253, 1
        %s257 = scalar_select %p256, %s253, 1
        %s258 = smul.addr %s255, 2
        %s259 = sadd.s32 %s257, %s258
        %s260 = smul.addr %s259, 2
        %s261 = scalar_lea.vmem %s4, %s260
        %p262 = pneg %p138
        %p263 = pneg %p135
        %p264 = pneg %p164
        %p265 = pneg %p161
        %s266 = smul.u32 2, %s27
        %p267 = scmp.lt.s32.totalorder %s28, 1
        %s268 = scalar_select %p267, %s28, 1
        %p269 = scmp.lt.s32.totalorder %s266, 1
        %s270 = scalar_select %p269, %s266, 1
        %s271 = smul.addr %s268, 2
        %s272 = sadd.s32 %s270, %s271
        %s273 = smul.addr %s272, 8
        %s274 = scalar_lea.vmem %s1, %s273
        %s275 = smul.u32 2, %s27
        %p276 = scmp.lt.s32.totalorder %s28, 1
        %s277 = scalar_select %p276, %s28, 1
        %s278 = scalar_lea.vmem %s2, %s277
        %p279 = scmp.lt.s32.totalorder %s28, 1
        %s280 = scalar_select %p279, %s28, 1
        %s281 = smul.addr %s280, 2
        %s282 = smul.addr %s281, 4
        %s283 = scalar_lea.vmem %s3, %s282
        %s284 = smul.u32 2, %s27
        %p285 = scmp.lt.s32.totalorder %s28, 1
        %s286 = scalar_select %p285, %s28, 1
        %p287 = scmp.lt.s32.totalorder %s284, 1
        %s288 = scalar_select %p287, %s284, 1
        %s289 = smul.addr %s286, 2
        %s290 = sadd.s32 %s288, %s289
        %s291 = smul.addr %s290, 2
        %s292 = scalar_lea.vmem %s4, %s291
        %s293 = smul.u32 2, %s27
        %s294 = smul.u32 2, %s27
        %p296 = scmp.eq.s32.totalorder %s28, 0
        // Predicated region
        $region37: #{tpu_custom_call.1} parent=35 // pred_check
          %p297 = pneg %p296
        $region38: #{tpu_custom_call.1} parent=35 // pred_check_branch
          %299 = sbr.rel (%p297) target = $region40
        $region39: #{tpu_custom_call.1} parent=35 // pred_region
          %300 = vst [vmem:[#allocation4] sm:$0xff] 0.0
          %301 = vst [vmem:[#allocation4 + $0x8] sm:$0xff] 0.0
        $region40: #{tpu_custom_call.1} parent=35 // pred_fallthru
          _
        %s302 = sshra.s32 %s28, 7
        %s303 = sand.u32 %s28, 127
        %s304 = sadd.s32 %s302, %s27
        %s305 = smul.u32 %s304, 128
        %s306 = sshra.s32 %s28, 7
        %s307 = sand.u32 %s28, 127
        %s308 = sadd.s32 %s305, %s307
        %s309 = sld [smem:[#allocation3 + %s308]]
        %p310 = scmp.gt.s32.totalorder %s309, 0
        // Predicated region
        $region41: #{tpu_custom_call.1} parent=35 // pred_check
          %p311 = pneg %p310
        $region42: #{tpu_custom_call.1} parent=35 // pred_check_branch
          %313 = sbr.rel (%p311) target = $region44
        $region43: #{tpu_custom_call.1} parent=35 // pred_region
          %v314 = vld [vmem:[%s274] sm:$0xff]
          %v315 = vld [vmem:[%s274 + $0x8] sm:$0xff]
          %v316 = vld [vmem:[%s278] sm:$0x1]
          %318 = vset.pattern.permute.xlu0 0
          %319 = vperm.xlu0 %318, %v314
          %v320 = vpop.permute.xlu0 %319
          %323 = vset.pattern.permute.xlu0 0
          %324 = vperm.xlu0 %323, %v315
          %v325 = vpop.permute.xlu0 %324
          %v328 = vlaneseq
          %v329 = vshrl.u32 %v328, 7
          %v330 = vsub.s32 0, %v329
          %v331 = vrot.slane %v316, %v330
          %v333 = vadd.f32 %v320, %v331
          %v334 = vadd.f32 %v325, %v331
          %vm335 = vcmp.gt.f32.partialorder %v333, 0.0
          %vm336 = vcmp.gt.f32.partialorder %v334, 0.0
          %v337 = vmul.f32 %v333, 0.2
          %v338 = vmul.f32 %v334, 0.2
          %v339 = vsel %vm335, %v333, %v337
          %v340 = vsel %vm336, %v334, %v338
          %v341 = vld [vmem:[%s292] sm:$0x3]
          %v342 = vld [vmem:[%s292 + $0x2] sm:$0x3]
          %v343 = vunpack.c.0.s8 %v341
          %v344 = vunpack.c.0.s8 %v342
          %v345 = vcvt.s32.f32 %v343
          %v346 = vcvt.s32.f32 %v344
          %vm347 = vcmp.gt.f32.partialorder %v345, 0.0
          %vm348 = vcmp.gt.f32.partialorder %v346, 0.0
          %v349 = vsel %vm347, %v339, -inf
          %v350 = vsel %vm348, %v340, -inf
          %vm351 = vcmask 130048
          %v352 = vsel %vm351, %v349, -inf
          %353 = vmax.xlane.f32.xlu0 %v352
          %v354 = vpop.xlane.xlu0 %353
          %v355 = vsel %vm351, %v350, -inf
          %356 = vmax.xlane.f32.xlu0 %v355
          %v357 = vpop.xlane.xlu0 %356
          %vm358 = vcmp.gt.f32.partialorder %v354, -inf
          %vm359 = vcmp.gt.f32.partialorder %v357, -inf
          %v360 = vsel %vm358, %v354, 0.0
          %v361 = vsel %vm359, %v357, 0.0
          %v362 = vsub.f32 %v349, %v360
          %v363 = vsub.f32 %v350, %v361
          %v364 = vmul.f32 %v362, 1.442695
          %v365 = vpow.pop %v364
          %v366 = vmul.f32 %v363, 1.442695
          %v367 = vpow.pop %v366
          %v368 = vmul.f32 %v345, %v365
          %v369 = vmul.f32 %v346, %v367
          %v370 = vsel %vm351, %v368, 0.0
          %371 = vadd.xlane.f32.xlu0 %v370
          %v372 = vpop.xlane.xlu0 %371
          %v373 = vsel %vm351, %v369, 0.0
          %374 = vadd.xlane.f32.xlu0 %v373
          %v375 = vpop.xlane.xlu0 %374
          %vm376 = vcmp.gt.f32.partialorder %v372, 0.0
          %vm377 = vcmp.gt.f32.partialorder %v375, 0.0
          %v378 = vrcp.pop %v372
          %v379 = vrcp.pop %v375
          %v380 = vsel %vm376, %v378, 0.0
          %v381 = vsel %vm377, %v379, 0.0
          %v382 = vpack.c.bf16 %v369, %v368
          %v383 = vld [vmem:[%s283] sm:$0xf]
          %v384 = vld [vmem:[%s283 + $0x4] sm:$0xf]
          %v387 = vunpack.c.l.b16 %v383
          %v388 = vunpack.c.l.b16 %v384
          %v389 = vpack.c.b16 %v388, %v387
          %v392 = vsel %vm351, %v382, 0
          %394 = vmatprep.subr.bf16.mxu0 0
          %395 = vmatpush1.bf16.msra.mxu0 %v389
          %396 = vmatprep.subr.bf16.mxu0 0
          %397 = vmatpush1.bf16.msra.mxu0 0
          %398 = vmatprep.subr.bf16.mxu0 0
          %399 = vmatpush1.bf16.msra.mxu0 0
          %400 = vmatprep.subr.bf16.mxu0 0
          %401 = vmatpush1.bf16.msra.mxu0 0
          %402 = vmatprep.subr.bf16.mxu0 0
          %403 = vmatpush1.bf16.msra.mxu0 0
          %404 = vmatprep.subr.bf16.mxu0 0
          %405 = vmatpush1.bf16.msra.mxu0 0
          %406 = vmatprep.subr.bf16.mxu0 0
          %407 = vmatpush1.bf16.msra.mxu0 0
          %408 = vmatprep.subr.bf16.mxu0 0
          %409 = vmatpush1.bf16.msra.mxu0 0
          %410 = vmatprep.subr.bf16.mxu0 0
          %411 = vmatpush1.bf16.msra.mxu0 0
          %412 = vmatprep.subr.bf16.mxu0 0
          %413 = vmatpush1.bf16.msra.mxu0 0
          %414 = vmatprep.subr.bf16.mxu0 0
          %415 = vmatpush1.bf16.msra.mxu0 0
          %416 = vmatprep.subr.bf16.mxu0 0
          %417 = vmatpush1.bf16.msra.mxu0 0
          %418 = vmatprep.subr.bf16.mxu0 0
          %419 = vmatpush1.bf16.msra.mxu0 0
          %420 = vmatprep.subr.bf16.mxu0 0
          %421 = vmatpush1.bf16.msra.mxu0 0
          %422 = vmatprep.subr.bf16.mxu0 0
          %423 = vmatpush1.bf16.msra.mxu0 0
          %424 = vmatprep.subr.bf16.mxu0 0
          %425 = vmatpush1.bf16.msra.mxu0 0
          %426 = vmatprep.mubr.bf16.mxu0 0
          %427 = vmatmul.mubr.bf16.gmra.mrb[0].mxu0 %v392
          %v428 = vpop.f32.mrb[0].mxu0
          %v429 = vadd.f32 0.0, %v428
          %v430 = vpop.f32.mrb[0].mxu0
          %v431 = vpop.f32.mrb[0].mxu0
          %v432 = vadd.f32 0.0, %v431
          %v433 = vpop.f32.mrb[0].mxu0
          %434 = vdwg.mxu0
          %v435 = vld [vmem:[#allocation4] sm:$0xff]
          %v436 = vld [vmem:[#allocation4 + $0x8] sm:$0xff]
          %v437 = vmul.f32 %v429, %v380
          %v438 = vmul.f32 %v432, %v381
          %v439 = vadd.f32 %v435, %v437
          %v440 = vadd.f32 %v436, %v438
          %441 = vst [vmem:[#allocation4] sm:$0xff] %v439
          %442 = vst [vmem:[#allocation4 + $0x8] sm:$0xff] %v440
        $region44: #{tpu_custom_call.1} parent=35 // pred_fallthru
          _
        // Predicated region
        $region45: #{tpu_custom_call.1} parent=35 // pred_check
          %p443 = pneg %p161
        $region46: #{tpu_custom_call.1} parent=35 // pred_check_branch
          %445 = sbr.rel (%p443) target = $region48
        $region47: #{tpu_custom_call.1} parent=35 // pred_region
          %s446 = smul.u32 2, %s27
          %s448 = ssub.s32 256, 256
          %449 = vsyncadd [#allocation5], %s448
          %s450 = smul.addr %s446, 128
          %s451 = scalar_lea.hbm %s5, %s450
          %s452 = sshll.u32 [#allocation4], 4
          %s453 = int_to_ptr.vmem [resolvable:$true] %s452
          %458 = dma.vmem_to_hbm [thread:$0]  %s453, 256, %s451, [#allocation5], 128, 128, 8
        $region48: #{tpu_custom_call.1} parent=35 // pred_fallthru
          _
        // Predicated region
        $region49: #{tpu_custom_call.1} parent=35 // pred_check
          %p459 = pneg %p161
        $region50: #{tpu_custom_call.1} parent=35 // pred_check_branch
          %461 = sbr.rel (%p459) target = $region52
        $region51: #{tpu_custom_call.1} parent=35 // pred_region
          %462 = dma.done [#allocation5], 256
        $region52: #{tpu_custom_call.1} parent=35 // pred_fallthru
          _
      $region36: #{tpu_custom_call.1} parent=5 // pred_fallthru
        _
      %p463 = scmp.le.s32.totalorder 2, %s18
      // Predicated region
      $region53: #{tpu_custom_call.1} parent=5 // pred_check
        %p464 = pneg %p463
      $region54: #{tpu_custom_call.1} parent=5 // pred_check_branch
        %466 = sbr.rel (%p464) target = $region56
      $region55: #{tpu_custom_call.1} parent=5 // pred_region
        %s467 = ssub.s32 %s18, 2
      $region56: #{tpu_custom_call.1} parent=5 // pred_fallthru
        _
    $region6: #{tpu_custom_call.1} parent=1 // loop_footer
      %s22 = sadd.s32 1, %s18
    $region7: #{tpu_custom_call.1} parent=1 // loop_footer_branch
      %17 = sbr.rel target = $region3
    $region8: #{tpu_custom_call.1} parent=1 // loop_exit
      _
    %468 = vsyncpa [#allocation5], 1
    %s469 = scalar_lea.sflag [#allocation5], 1
    %470 = vsyncpa %s469, 1

</llo_original>
